<compile_context>
chip_gen: v7x
topology: tpu7x:2x2x1
jax: 0.10.0
libtpu: 0.0.40
codegen_flags: <defaults>
</compile_context>

<pallas_src>
import functools
import math

import jax
import jax.numpy as jnp
from jax import lax
from jax.experimental import pallas as pl
from jax.experimental.pallas import tpu as pltpu


def _xyz_kernel(x_ref, wh_ref, bh_ref, wo_ref, bo_ref, o_ref, *,
                out_dim, compute_dtype, precision, exact_gelu):
    # fc_h: (tm, D) @ (D, CH) -> (tm, CH), f32 accumulation on the MXU.
    x = x_ref[...].astype(compute_dtype)
    h = jnp.dot(x, wh_ref[...],
                preferred_element_type=jnp.float32, precision=precision)
    h = h + bh_ref[...]                       # (1, CH) f32 bias, broadcast rows

    if exact_gelu:
        # exact erf GELU (matches torch.nn.functional.gelu default) - VALU poly
        h = 0.5 * h * (1.0 + lax.erf(h * (1.0 / math.sqrt(2.0))))
    else:
        # tanh GELU - transcendental runs on the EUP (separate VLIW slot)
        c = math.sqrt(2.0 / math.pi)
        h = 0.5 * h * (1.0 + jnp.tanh(c * (h + 0.044715 * h * h * h)))

    # fc_o: (tm, CH) @ (CH, OUT_PAD=128) -> (tm, OUT_PAD); lane-dense MXU N-dim.
    out = jnp.dot(h.astype(compute_dtype), wo_ref[...],
                  preferred_element_type=jnp.float32, precision=precision)
    out = out + bo_ref[...]
    # Only the real columns go to HBM (masked vst hides under the MXU work).
    o_ref[...] = out[:, :out_dim].astype(o_ref.dtype)


def prepare_params(w_h, b_h, w_o, b_o, *, compute_dtype=jnp.bfloat16):
    """One-time parameter prep (keep OUT of the per-call hot path):
       weights stored (in, out) in the MXU compute dtype, W_o/b_o lane-padded
       to 128 output columns, biases kept in f32 (added to the f32 acc)."""
    d, ch = w_h.shape
    out_dim = w_o.shape[1]
    out_pad = max(128, pl.cdiv(out_dim, 128) * 128)
    wo_p = jnp.zeros((ch, out_pad), jnp.float32).at[:, :out_dim].set(
        w_o.astype(jnp.float32))
    bo_p = jnp.zeros((1, out_pad), jnp.float32).at[0, :out_dim].set(
        b_o.astype(jnp.float32))
    return {
        "w_h": w_h.astype(compute_dtype),
        "b_h": b_h.reshape(1, ch).astype(jnp.float32),
        "w_o": wo_p.astype(compute_dtype),
        "b_o": bo_p,
        "out_dim": out_dim,
        "compute_dtype": compute_dtype,
    }


def xyz_regressor(x, params, *, tm=512, exact_gelu=None, x_buffers=2):
    """x: (..., decoder_dim). Returns (..., 3) float32.

    tm: row tile; the largest tile that fits VMEM wins on all generations
    (sweep 256-512). exact_gelu=None -> auto (tanh approx for decoder_dim<=256).
    """
    w_h, b_h = params["w_h"], params["b_h"]
    w_o, b_o = params["w_o"], params["b_o"]
    out_dim = params["out_dim"]
    compute_dtype = params["compute_dtype"]

    orig_shape = x.shape
    d = orig_shape[-1]
    ch = w_h.shape[1]
    out_pad = w_o.shape[1]
    x2 = x.reshape(-1, d)
    n = x2.shape[0]

    if exact_gelu is None:
        # small D -> kernel would be VALU-bound on erf, use EUP tanh approx;
        # large D -> erf is free filler under the MXU, keep exact parity.
        exact_gelu = d > 256

    if jnp.dtype(compute_dtype) == jnp.dtype(jnp.float32):
        precision = lax.Precision.HIGHEST     # explicit multi-pass f32 on MXU
    else:
        precision = lax.Precision.DEFAULT     # single-pass bf16 MXU

    # --- row tile ------------------------------------------------------------
    n8 = pl.cdiv(n, 8) * 8
    if n >= 64:
        # ensure >=2 grid steps so the "parallel" axis can shard across both
        # TensorCores on v7x (megacore on other generations).
        tm_cap = pl.cdiv(pl.cdiv(n, 2), 8) * 8
    else:
        tm_cap = n8
    tm_eff = max(8, min(tm, tm_cap))

    # --- VMEM budget: per-generation cap with headroom -------------------------
    xb = jnp.dtype(x.dtype).itemsize
    cb = jnp.dtype(compute_dtype).itemsize
    try:
        phys_vmem = pltpu.get_tpu_info().vmem_capacity_bytes
    except Exception:
        phys_vmem = 64 << 20                  # conservative (v7x per-TC size)
    vmem_cap = (phys_vmem * 3) // 4           # headroom for compiler scratch

    def working_set(t):
        return (
            x_buffers * t * d * xb            # pipelined x tiles
            + t * d * cb                      # compute-dtype copy of x tile
            + d * ch * cb                     # W_h (single-buffered)
            + ch * 4                          # b_h
            + ch * out_pad * cb               # W_o
            + out_pad * 4                     # b_o
            + 2 * t * out_dim * 4             # output tiles (narrow)
            + t * ch * (4 + cb)               # h (f32) + compute-dtype copy
            + t * out_pad * 4                 # fc_o result before slicing
        )

    # auto-shrink the row tile if the working set would not fit the cap.
    # TODO(synk): if decoder_dim grows so large that the weights alone exceed
    # the cap (>~16k bf16 on v7x), add a K-tiling grid axis over decoder_dim
    # with an f32 accumulator scratch instead of shrinking tm further.
    while tm_eff > 64 and working_set(tm_eff) + (8 << 20) > vmem_cap:
        tm_eff = max(64, (tm_eff // 2 + 7) // 8 * 8)

    vmem_limit = int(min(max(working_set(tm_eff) + (8 << 20), 32 << 20),
                         vmem_cap))

    grid = (pl.cdiv(n, tm_eff),)

    cost = pl.CostEstimate(
        flops=2 * n * d * ch + 2 * n * ch * out_pad,
        transcendentals=n * ch,
        bytes_accessed=(n * d * xb + d * ch * cb + ch * out_pad * cb
                        + n * out_dim * 4),
    )

    kernel = functools.partial(
        _xyz_kernel, out_dim=out_dim, compute_dtype=compute_dtype,
        precision=precision, exact_gelu=exact_gelu)

    y = pl.pallas_call(
        kernel,
        out_shape=jax.ShapeDtypeStruct((n, out_dim), jnp.float32),
        grid_spec=pltpu.PrefetchScalarGridSpec(
            num_scalar_prefetch=0,
            grid=grid,
            in_specs=[
                pl.BlockSpec((tm_eff, d), lambda i: (i, 0),           # x tile
                             pipeline_mode=pl.Buffered(x_buffers)),
                pl.BlockSpec((d, ch), lambda i: (0, 0),               # W_h
                             pipeline_mode=pl.Buffered(1)),
                pl.BlockSpec((1, ch), lambda i: (0, 0),               # b_h
                             pipeline_mode=pl.Buffered(1)),
                pl.BlockSpec((ch, out_pad), lambda i: (0, 0),         # W_o
                             pipeline_mode=pl.Buffered(1)),
                pl.BlockSpec((1, out_pad), lambda i: (0, 0),          # b_o
                             pipeline_mode=pl.Buffered(1)),
            ],
            out_specs=pl.BlockSpec((tm_eff, out_dim), lambda i: (i, 0)),
        ),
        compiler_params=pltpu.CompilerParams(
            dimension_semantics=("parallel",),
            vmem_limit_bytes=vmem_limit,
        ),
        cost_estimate=cost,
    )(x2, w_h, b_h, w_o, b_o)

    return y.reshape(*orig_shape[:-1], out_dim)


def init_params(key, decoder_dim, ch=1024, out_dim=3):
    """xavier_uniform_ on weights, PyTorch-default uniform bias init.
    Weights stored as (in, out), i.e. transposed vs torch's (out, in)."""
    k1, k2, k3, k4 = jax.random.split(key, 4)

    def xavier(k, fan_in, fan_out):
        bound = math.sqrt(6.0 / (fan_in + fan_out))
        return jax.random.uniform(k, (fan_in, fan_out), jnp.float32,
                                  -bound, bound)

    def bias(k, fan_in, size):
        bound = 1.0 / math.sqrt(fan_in)
        return jax.random.uniform(k, (size,), jnp.float32, -bound, bound)

    w_h = xavier(k1, decoder_dim, ch)
    b_h = bias(k2, decoder_dim, ch)
    w_o = xavier(k3, ch, out_dim)
    b_o = bias(k4, ch, out_dim)
    return w_h, b_h, w_o, b_o


if __name__ == "__main__":
    key = jax.random.PRNGKey(0)
    k_x, k_p = jax.random.split(key)

    batch, seq, decoder_dim = 2, 8, 32
    x = jax.random.normal(k_x, (batch, seq, decoder_dim), jnp.float32)

    w_h, b_h, w_o, b_o = init_params(k_p, decoder_dim)
    params = prepare_params(w_h, b_h, w_o, b_o)      # one-time prep (bf16 MXU)

    y = xyz_regressor(x, params)
    y = jax.block_until_ready(y)

    # reference in plain JAX: exact erf GELU, full f32 matmuls
    h_ref = x @ w_h + b_h
    h_ref = 0.5 * h_ref * (1.0 + lax.erf(h_ref / math.sqrt(2.0)))
    y_ref = h_ref @ w_o + b_o

    assert y.shape == (batch, seq, 3)
    # bf16 MXU operands + tanh GELU => relaxed tolerance vs exact f32 reference
    assert jnp.allclose(y, y_ref, atol=5e-2, rtol=5e-2), (
        float(jnp.max(jnp.abs(y - y_ref))))

    print("KERNEL_OK")
</pallas_src>

<mosaic_0001>
module attributes {stable_mosaic.version = 11 : i64} {
  func.func @_xyz_kernel(%arg0: i32, %arg1: memref<16x32xf32, #tpu.memory_space<vmem>>, %arg2: memref<32x1024xbf16, #tpu.memory_space<vmem>>, %arg3: memref<1x1024xf32, #tpu.memory_space<vmem>>, %arg4: memref<1024x128xbf16, #tpu.memory_space<vmem>>, %arg5: memref<1x128xf32, #tpu.memory_space<vmem>>, %arg6: memref<16x3xf32, #tpu.memory_space<vmem>>) attributes {dimension_semantics = [#tpu.dimension_semantics<parallel>], iteration_bounds = array<i64: 1>, scalar_prefetch = 0 : i64, scratch_operands = 0 : i64, tpu.core_type = #tpu.core_type<tc>, window_params = [{pipeline_mode = #tpu.pipeline_mode<double_buffered>, transform_indices = @transform_0, window_bounds = array<i64: 16, 32>}, {pipeline_mode = #tpu.pipeline_mode<synchronous>, transform_indices = @transform_1, window_bounds = array<i64: 32, 1024>}, {pipeline_mode = #tpu.pipeline_mode<synchronous>, transform_indices = @transform_2, window_bounds = array<i64: 1, 1024>}, {pipeline_mode = #tpu.pipeline_mode<synchronous>, transform_indices = @transform_3, window_bounds = array<i64: 1024, 128>}, {pipeline_mode = #tpu.pipeline_mode<synchronous>, transform_indices = @transform_4, window_bounds = array<i64: 1, 128>}, {transform_indices = @transform_5, window_bounds = array<i64: 16, 3>}]} {
    %c0 = arith.constant 0 : index
    %c0_0 = arith.constant 0 : index
    %0 = vector.load %arg1[%c0, %c0_0] : memref<16x32xf32, #tpu.memory_space<vmem>>, vector<16x32xf32>
    %1 = arith.truncf %0 : vector<16x32xf32> to vector<16x32xbf16>
    %c0_1 = arith.constant 0 : index
    %c0_2 = arith.constant 0 : index
    %2 = vector.load %arg2[%c0_1, %c0_2] : memref<32x1024xbf16, #tpu.memory_space<vmem>>, vector<32x1024xbf16>
    %cst = arith.constant dense<0.000000e+00> : vector<16x1024xf32>
    %3 = tpu.matmul %1, %2, %cst {dimension_numbers = #tpu.dot_dimension_numbers<[1], [0], [0], [1], [0, 0, 1, 1], [], []>} : vector<16x32xbf16>, vector<32x1024xbf16>, vector<16x1024xf32> -> vector<16x1024xf32>
    %c0_3 = arith.constant 0 : index
    %c0_4 = arith.constant 0 : index
    %4 = vector.load %arg3[%c0_3, %c0_4] : memref<1x1024xf32, #tpu.memory_space<vmem>>, vector<1x1024xf32>
    %5 = vector.broadcast %4 : vector<1x1024xf32> to vector<16x1024xf32>
    %6 = arith.addf %3, %5 : vector<16x1024xf32>
    %cst_5 = arith.constant 5.000000e-01 : f32
    %7 = vector.broadcast %cst_5 : f32 to vector<16x1024xf32>
    %8 = arith.mulf %7, %6 : vector<16x1024xf32>
    %cst_6 = arith.constant 4.471500e-02 : f32
    %9 = vector.broadcast %cst_6 : f32 to vector<16x1024xf32>
    %10 = arith.mulf %9, %6 : vector<16x1024xf32>
    %11 = arith.mulf %10, %6 : vector<16x1024xf32>
    %12 = arith.mulf %11, %6 : vector<16x1024xf32>
    %13 = arith.addf %6, %12 : vector<16x1024xf32>
    %cst_7 = arith.constant 0.797884583 : f32
    %14 = vector.broadcast %cst_7 : f32 to vector<16x1024xf32>
    %15 = arith.mulf %14, %13 : vector<16x1024xf32>
    %16 = math.tanh %15 : vector<16x1024xf32>
    %cst_8 = arith.constant 1.000000e+00 : f32
    %17 = vector.broadcast %cst_8 : f32 to vector<16x1024xf32>
    %18 = arith.addf %17, %16 : vector<16x1024xf32>
    %19 = arith.mulf %8, %18 : vector<16x1024xf32>
    %20 = arith.truncf %19 : vector<16x1024xf32> to vector<16x1024xbf16>
    %c0_9 = arith.constant 0 : index
    %c0_10 = arith.constant 0 : index
    %21 = vector.load %arg4[%c0_9, %c0_10] : memref<1024x128xbf16, #tpu.memory_space<vmem>>, vector<1024x128xbf16>
    %cst_11 = arith.constant dense<0.000000e+00> : vector<16x128xf32>
    %22 = tpu.matmul %20, %21, %cst_11 {dimension_numbers = #tpu.dot_dimension_numbers<[1], [0], [0], [1], [0, 0, 1, 1], [], []>} : vector<16x1024xbf16>, vector<1024x128xbf16>, vector<16x128xf32> -> vector<16x128xf32>
    %c0_12 = arith.constant 0 : index
    %c0_13 = arith.constant 0 : index
    %23 = vector.load %arg5[%c0_12, %c0_13] : memref<1x128xf32, #tpu.memory_space<vmem>>, vector<1x128xf32>
    %24 = vector.broadcast %23 : vector<1x128xf32> to vector<16x128xf32>
    %25 = arith.addf %22, %24 : vector<16x128xf32>
    %26 = vector.extract_strided_slice %25 {offsets = [0, 0], sizes = [16, 3], strides = [1, 1]} : vector<16x128xf32> to vector<16x3xf32>
    %c0_14 = arith.constant 0 : index
    %c0_15 = arith.constant 0 : index
    %27 = vector.load %arg6[%c0_14, %c0_15] : memref<16x3xf32, #tpu.memory_space<vmem>>, vector<16x3xf32>
    tpu.vector_store %arg6[%c0_14, %c0_15], %26 {strides = array<i32>} : memref<16x3xf32, #tpu.memory_space<vmem>>, vector<16x3xf32>,
    return
  }
  func.func @transform_0(%arg0: i32) -> (i32, i32) {
    %c0_i32 = arith.constant 0 : i32
    %c0_i32_0 = arith.constant 0 : i32
    return %arg0, %c0_i32 : i32, i32
  }
  func.func @transform_1(%arg0: i32) -> (i32, i32) {
    %c0_i32 = arith.constant 0 : i32
    %c0_i32_0 = arith.constant 0 : i32
    %c0_i32_1 = arith.constant 0 : i32
    return %c0_i32, %c0_i32_0 : i32, i32
  }
  func.func @transform_2(%arg0: i32) -> (i32, i32) {
    %c0_i32 = arith.constant 0 : i32
    %c0_i32_0 = arith.constant 0 : i32
    %c0_i32_1 = arith.constant 0 : i32
    return %c0_i32, %c0_i32_0 : i32, i32
  }
  func.func @transform_3(%arg0: i32) -> (i32, i32) {
    %c0_i32 = arith.constant 0 : i32
    %c0_i32_0 = arith.constant 0 : i32
    %c0_i32_1 = arith.constant 0 : i32
    return %c0_i32, %c0_i32_0 : i32, i32
  }
  func.func @transform_4(%arg0: i32) -> (i32, i32) {
    %c0_i32 = arith.constant 0 : i32
    %c0_i32_0 = arith.constant 0 : i32
    %c0_i32_1 = arith.constant 0 : i32
    return %c0_i32, %c0_i32_0 : i32, i32
  }
  func.func @transform_5(%arg0: i32) -> (i32, i32) {
    %c0_i32 = arith.constant 0 : i32
    %c0_i32_0 = arith.constant 0 : i32
    return %arg0, %c0_i32 : i32, i32
  }
}

</mosaic_0001>

<llo_original>
// kernel: tpu_custom_call.1
$region0: #{tpu_custom_call.1}
  #allocation0 [shape = 'u32[]', space=smem, size = 0x4, offset = 0x4, fixed_abs, tag = 'smem constant byte address 0x4 - core index']
  #allocation1 [shape = 'u32[144,128]{1,0:T(1,128)}', space=vmem, size = 0x12000, scoped, tag = 'internal scratch']
  %s0 = inlined_call_operand.hbm [shape: f32[16,32], index: 0, kind: input, shape index: {}]
  %s1 = inlined_call_operand.hbm [shape: bf16[32,1024], index: 1, kind: input, shape index: {}]
  %s2 = inlined_call_operand.hbm [shape: f32[1,1024], index: 2, kind: input, shape index: {}]
  %s3 = inlined_call_operand.hbm [shape: bf16[1024,128], index: 3, kind: input, shape index: {}]
  %s4 = inlined_call_operand.vmem [shape: f32[1,128], index: 4, kind: input, shape index: {}]
  %s5 = inlined_call_operand.vmem [shape: f32[16,3], index: 5, kind: output, shape index: {}]
  %s6 = sld [smem:[#allocation0]]
  $region46: #{tpu_custom_call.1} parent=0
    _
  %s8 = ssub.s32 1, %s6
  %s9 = scalar_select 0, %s8, %s6
  $region1: #{tpu_custom_call.1} parent=0
    #allocation2 [shape = 'u8[8192]{0}', space=vmem, size = 0x2000, scoped, tag = 'input window, operand 0, single buffered']
    #allocation3 [shape = 's32[1]{0}', space=sflag, size = 0x4, scoped, tag = 'scoped memory for tpu_custom_call.1']
    #allocation4 [shape = 'u8[65536]{0}', space=vmem, size = 0x10000, scoped, tag = 'input window, operand 1, single buffered']
    #allocation5 [shape = 's32[1]{0}', space=sflag, size = 0x4, scoped, tag = 'scoped memory for tpu_custom_call.1']
    #allocation6 [shape = 'u8[4096]{0}', space=vmem, size = 0x1000, scoped, tag = 'input window, operand 2, single buffered']
    #allocation7 [shape = 'u8[262144]{0}', space=vmem, size = 0x40000, scoped, tag = 'input window, operand 3, single buffered']
    #allocation8 [shape = 's32[1]{0}', space=sflag, size = 0x4, scoped, tag = 'scoped memory for tpu_custom_call.1']
    %10 = vsyncpa [#allocation3], 0
    %11 = vsyncpa [#allocation5], 0
    %12 = vsyncpa [#allocation8], 0
    // Predicated region
    $region2: #{tpu_custom_call.1} parent=1 // pred_check
      _
    $region3: #{tpu_custom_call.1} parent=1 // pred_check_branch
      %14 = sbr.rel (0) target = $region5
    $region4: #{tpu_custom_call.1} parent=1 // pred_region
      %s16 = ssub.s32 256, 256
      %17 = vsyncadd [#allocation3], %s16
      %s18 = sshll.u32 [#allocation2], 4
      %s19 = int_to_ptr.vmem [resolvable:$true] %s18
      %24 = dma.hbm_to_vmem [thread:$0]  %s0, 256, %s19, [#allocation3], 128, 128, 8
    $region5: #{tpu_custom_call.1} parent=1 // pred_fallthru
      _
    // Predicated region
    $region6: #{tpu_custom_call.1} parent=1 // pred_check
      _
    $region7: #{tpu_custom_call.1} parent=1 // pred_check_branch
      %26 = sbr.rel (0) target = $region9
    $region8: #{tpu_custom_call.1} parent=1 // pred_region
      %s28 = ssub.s32 2048, 2048
      %29 = vsyncadd [#allocation5], %s28
      %s30 = sshll.u32 [#allocation4], 4
      %s31 = int_to_ptr.vmem [resolvable:$true] %s30
      %36 = dma.hbm_to_vmem [thread:$0]  %s1, 2048, %s31, [#allocation5], 512, 512, 32
    $region9: #{tpu_custom_call.1} parent=1 // pred_fallthru
      _
    // Predicated region
    $region10: #{tpu_custom_call.1} parent=1 // pred_check
      _
    $region11: #{tpu_custom_call.1} parent=1 // pred_check_branch
      %38 = sbr.rel (0) target = $region13
    $region12: #{tpu_custom_call.1} parent=1 // pred_region
      %s40 = ssub.s32 128, 128
      %41 = vsyncadd [#allocation5], %s40
      %s43 = sshll.u32 [#allocation6], 4
      %s44 = int_to_ptr.vmem [resolvable:$true] %s43
      %46 = dma.hbm_to_vmem [thread:$0]  %s2, 128, %s44, [#allocation5]
    $region13: #{tpu_custom_call.1} parent=1 // pred_fallthru
      _
    // Predicated region
    $region14: #{tpu_custom_call.1} parent=1 // pred_check
      _
    $region15: #{tpu_custom_call.1} parent=1 // pred_check_branch
      %48 = sbr.rel (0) target = $region17
    $region16: #{tpu_custom_call.1} parent=1 // pred_region
      %s50 = ssub.s32 8192, 8192
      %51 = vsyncadd [#allocation8], %s50
      %s52 = sshll.u32 [#allocation7], 4
      %s53 = int_to_ptr.vmem [resolvable:$true] %s52
      %58 = dma.hbm_to_vmem [thread:$0]  %s3, 8192, %s53, [#allocation8], 64, 64, 4
    $region17: #{tpu_custom_call.1} parent=1 // pred_fallthru
      _
    // Predicated region
    $region18: #{tpu_custom_call.1} parent=1 // pred_check
      _
    $region19: #{tpu_custom_call.1} parent=1 // pred_check_branch
      %60 = sbr.rel (0) target = $region21
    $region20: #{tpu_custom_call.1} parent=1 // pred_region
      _
    $region21: #{tpu_custom_call.1} parent=1 // pred_fallthru
      _
    // Predicated region
    $region22: #{tpu_custom_call.1} parent=1 // pred_check
      _
    $region23: #{tpu_custom_call.1} parent=1 // pred_check_branch
      %62 = sbr.rel (0) target = $region25
    $region24: #{tpu_custom_call.1} parent=1 // pred_region
      %63 = dma.done [#allocation3], 256
    $region25: #{tpu_custom_call.1} parent=1 // pred_fallthru
      _
    // Predicated region
    $region26: #{tpu_custom_call.1} parent=1 // pred_check
      _
    $region27: #{tpu_custom_call.1} parent=1 // pred_check_branch
      %65 = sbr.rel (0) target = $region29
    $region28: #{tpu_custom_call.1} parent=1 // pred_region
      %66 = dma.done [#allocation5], 2048
    $region29: #{tpu_custom_call.1} parent=1 // pred_fallthru
      _
    // Predicated region
    $region30: #{tpu_custom_call.1} parent=1 // pred_check
      _
    $region31: #{tpu_custom_call.1} parent=1 // pred_check_branch
      %68 = sbr.rel (0) target = $region33
    $region32: #{tpu_custom_call.1} parent=1 // pred_region
      %69 = dma.done [#allocation5], 128
    $region33: #{tpu_custom_call.1} parent=1 // pred_fallthru
      _
    // Predicated region
    $region34: #{tpu_custom_call.1} parent=1 // pred_check
      _
    $region35: #{tpu_custom_call.1} parent=1 // pred_check_branch
      %71 = sbr.rel (0) target = $region37
    $region36: #{tpu_custom_call.1} parent=1 // pred_region
      %72 = dma.done [#allocation8], 8192
    $region37: #{tpu_custom_call.1} parent=1 // pred_fallthru
      _
    %v74 = vld [vmem:[#allocation2] sm:$0xff]
    %v75 = vld [vmem:[#allocation2 + $0x8] sm:$0xff]
    %v76 = vpack.c.bf16 %v75, %v74
    %v77 = vld [vmem:[#allocation4] sm:$0xff]
    %v78 = vld [vmem:[#allocation4 + $0x8] sm:$0xff]
    %v79 = vld [vmem:[#allocation4 + $0x10] sm:$0xff]
    %v80 = vld [vmem:[#allocation4 + $0x18] sm:$0xff]
    %v81 = vld [vmem:[#allocation4 + $0x20] sm:$0xff]
    %v82 = vld [vmem:[#allocation4 + $0x28] sm:$0xff]
    %v83 = vld [vmem:[#allocation4 + $0x30] sm:$0xff]
    %v84 = vld [vmem:[#allocation4 + $0x38] sm:$0xff]
    %v85 = vld [vmem:[#allocation4 + $0x40] sm:$0xff]
    %v86 = vld [vmem:[#allocation4 + $0x48] sm:$0xff]
    %v87 = vld [vmem:[#allocation4 + $0x50] sm:$0xff]
    %v88 = vld [vmem:[#allocation4 + $0x58] sm:$0xff]
    %v89 = vld [vmem:[#allocation4 + $0x60] sm:$0xff]
    %v90 = vld [vmem:[#allocation4 + $0x68] sm:$0xff]
    %v91 = vld [vmem:[#allocation4 + $0x70] sm:$0xff]
    %v92 = vld [vmem:[#allocation4 + $0x78] sm:$0xff]
    %v93 = vld [vmem:[#allocation6] sm:$0xff]
    %v95 = vlaneseq
    %v96 = vshrl.u32 %v95, 7
    %v97 = vsub.s32 0, %v96
    %v98 = vrot.slane %v93, %v97
    %v99 = vlaneseq
    %v100 = vshrl.u32 %v99, 7
    %v101 = vsub.s32 1, %v100
    %v102 = vrot.slane %v93, %v101
    %v103 = vlaneseq
    %v104 = vshrl.u32 %v103, 7
    %v105 = vsub.s32 2, %v104
    %v106 = vrot.slane %v93, %v105
    %v107 = vlaneseq
    %v108 = vshrl.u32 %v107, 7
    %v109 = vsub.s32 3, %v108
    %v110 = vrot.slane %v93, %v109
    %v111 = vlaneseq
    %v112 = vshrl.u32 %v111, 7
    %v113 = vsub.s32 4, %v112
    %v114 = vrot.slane %v93, %v113
    %v115 = vlaneseq
    %v116 = vshrl.u32 %v115, 7
    %v117 = vsub.s32 5, %v116
    %v118 = vrot.slane %v93, %v117
    %v119 = vlaneseq
    %v120 = vshrl.u32 %v119, 7
    %v121 = vsub.s32 6, %v120
    %v122 = vrot.slane %v93, %v121
    %v123 = vlaneseq
    %v124 = vshrl.u32 %v123, 7
    %v125 = vsub.s32 7, %v124
    %v126 = vrot.slane %v93, %v125
    %v151 = vunpack.c.l.b16 %v77
    %v152 = vunpack.c.h.b16 %v77
    %v153 = vunpack.c.l.b16 %v78
    %v154 = vunpack.c.h.b16 %v78
    %v155 = vunpack.c.l.b16 %v79
    %v156 = vunpack.c.h.b16 %v79
    %v157 = vunpack.c.l.b16 %v80
    %v158 = vunpack.c.h.b16 %v80
    %v159 = vunpack.c.l.b16 %v81
    %v160 = vunpack.c.h.b16 %v81
    %v161 = vunpack.c.l.b16 %v82
    %v162 = vunpack.c.h.b16 %v82
    %v163 = vunpack.c.l.b16 %v83
    %v164 = vunpack.c.h.b16 %v83
    %v165 = vunpack.c.l.b16 %v84
    %v166 = vunpack.c.h.b16 %v84
    %v167 = vunpack.c.l.b16 %v85
    %v168 = vunpack.c.h.b16 %v85
    %v169 = vunpack.c.l.b16 %v86
    %v170 = vunpack.c.h.b16 %v86
    %v171 = vunpack.c.l.b16 %v87
    %v172 = vunpack.c.h.b16 %v87
    %v173 = vunpack.c.l.b16 %v88
    %v174 = vunpack.c.h.b16 %v88
    %v175 = vunpack.c.l.b16 %v89
    %v176 = vunpack.c.h.b16 %v89
    %v177 = vunpack.c.l.b16 %v90
    %v178 = vunpack.c.h.b16 %v90
    %v179 = vunpack.c.l.b16 %v91
    %v180 = vunpack.c.h.b16 %v91
    %v181 = vunpack.c.l.b16 %v92
    %v182 = vunpack.c.h.b16 %v92
    %v183 = vpack.c.b16 %v159, %v151
    %v184 = vpack.c.b16 %v160, %v152
    %v185 = vpack.c.b16 %v161, %v153
    %v186 = vpack.c.b16 %v162, %v154
    %v187 = vpack.c.b16 %v163, %v155
    %v188 = vpack.c.b16 %v164, %v156
    %v189 = vpack.c.b16 %v165, %v157
    %v190 = vpack.c.b16 %v166, %v158
    %v191 = vpack.c.b16 %v175, %v167
    %v192 = vpack.c.b16 %v176, %v168
    %v193 = vpack.c.b16 %v177, %v169
    %v194 = vpack.c.b16 %v178, %v170
    %v195 = vpack.c.b16 %v179, %v171
    %v196 = vpack.c.b16 %v180, %v172
    %v197 = vpack.c.b16 %v181, %v173
    %v198 = vpack.c.b16 %v182, %v174
    %vm215 = vcmask 261120
    %v217 = vsel %vm215, %v76, 0
    %219 = vmatprep.subr.bf16.mxu0 %v184
    %220 = vmatpush1.bf16.msra.mxu0 %v183
    %221 = vmatprep.subr.bf16.mxu0 %v192
    %222 = vmatpush1.bf16.msra.mxu0 %v191
    %223 = vmatprep.subr.bf16.mxu0 0
    %224 = vmatpush1.bf16.msra.mxu0 0
    %225 = vmatprep.subr.bf16.mxu0 0
    %226 = vmatpush1.bf16.msra.mxu0 0
    %227 = vmatprep.subr.bf16.mxu0 0
    %228 = vmatpush1.bf16.msra.mxu0 0
    %229 = vmatprep.subr.bf16.mxu0 0
    %230 = vmatpush1.bf16.msra.mxu0 0
    %231 = vmatprep.subr.bf16.mxu0 0
    %232 = vmatpush1.bf16.msra.mxu0 0
    %233 = vmatprep.subr.bf16.mxu0 0
    %234 = vmatpush1.bf16.msra.mxu0 0
    %235 = vmatprep.subr.bf16.mxu0 0
    %236 = vmatpush1.bf16.msra.mxu0 0
    %237 = vmatprep.subr.bf16.mxu0 0
    %238 = vmatpush1.bf16.msra.mxu0 0
    %239 = vmatprep.subr.bf16.mxu0 0
    %240 = vmatpush1.bf16.msra.mxu0 0
    %241 = vmatprep.subr.bf16.mxu0 0
    %242 = vmatpush1.bf16.msra.mxu0 0
    %243 = vmatprep.subr.bf16.mxu0 0
    %244 = vmatpush1.bf16.msra.mxu0 0
    %245 = vmatprep.subr.bf16.mxu0 0
    %246 = vmatpush1.bf16.msra.mxu0 0
    %247 = vmatprep.subr.bf16.mxu0 0
    %248 = vmatpush1.bf16.msra.mxu0 0
    %249 = vmatprep.subr.bf16.mxu0 0
    %250 = vmatpush1.bf16.msra.mxu0 0
    %251 = vmatprep.mubr.bf16.mxu0 0
    %252 = vmatmul.mubr.bf16.gmra.mrb[0].mxu0 %v217
    %v253 = vpop.f32.mrb[0].mxu0
    %v254 = vadd.f32 %v98, %v253
    %v255 = vpop.f32.mrb[0].mxu0
    %v256 = vadd.f32 %v102, %v255
    %v257 = vpop.f32.mrb[0].mxu0
    %v258 = vadd.f32 %v98, %v257
    %v259 = vpop.f32.mrb[0].mxu0
    %v260 = vadd.f32 %v102, %v259
    %261 = vdwg.mxu0
    %262 = vmatprep.subr.bf16.mxu0 %v186
    %263 = vmatpush1.bf16.msra.mxu0 %v185
    %264 = vmatprep.subr.bf16.mxu0 %v194
    %265 = vmatpush1.bf16.msra.mxu0 %v193
    %266 = vmatprep.subr.bf16.mxu0 0
    %267 = vmatpush1.bf16.msra.mxu0 0
    %268 = vmatprep.subr.bf16.mxu0 0
    %269 = vmatpush1.bf16.msra.mxu0 0
    %270 = vmatprep.subr.bf16.mxu0 0
    %271 = vmatpush1.bf16.msra.mxu0 0
    %272 = vmatprep.subr.bf16.mxu0 0
    %273 = vmatpush1.bf16.msra.mxu0 0
    %274 = vmatprep.subr.bf16.mxu0 0
    %275 = vmatpush1.bf16.msra.mxu0 0
    %276 = vmatprep.subr.bf16.mxu0 0
    %277 = vmatpush1.bf16.msra.mxu0 0
    %278 = vmatprep.subr.bf16.mxu0 0
    %279 = vmatpush1.bf16.msra.mxu0 0
    %280 = vmatprep.subr.bf16.mxu0 0
    %281 = vmatpush1.bf16.msra.mxu0 0
    %282 = vmatprep.subr.bf16.mxu0 0
    %283 = vmatpush1.bf16.msra.mxu0 0
    %284 = vmatprep.subr.bf16.mxu0 0
    %285 = vmatpush1.bf16.msra.mxu0 0
    %286 = vmatprep.subr.bf16.mxu0 0
    %287 = vmatpush1.bf16.msra.mxu0 0
    %288 = vmatprep.subr.bf16.mxu0 0
    %289 = vmatpush1.bf16.msra.mxu0 0
    %290 = vmatprep.subr.bf16.mxu0 0
    %291 = vmatpush1.bf16.msra.mxu0 0
    %292 = vmatprep.subr.bf16.mxu0 0
    %293 = vmatpush1.bf16.msra.mxu0 0
    %294 = vmatprep.mubr.bf16.mxu0 0
    %295 = vmatmul.mubr.bf16.gmra.mrb[0].mxu0 %v217
    %v296 = vpop.f32.mrb[0].mxu0
    %v297 = vadd.f32 %v106, %v296
    %v298 = vpop.f32.mrb[0].mxu0
    %v299 = vadd.f32 %v110, %v298
    %v300 = vpop.f32.mrb[0].mxu0
    %v301 = vadd.f32 %v106, %v300
    %v302 = vpop.f32.mrb[0].mxu0
    %v303 = vadd.f32 %v110, %v302
    %304 = vdwg.mxu0
    %305 = vmatprep.subr.bf16.mxu0 %v188
    %306 = vmatpush1.bf16.msra.mxu0 %v187
    %307 = vmatprep.subr.bf16.mxu0 %v196
    %308 = vmatpush1.bf16.msra.mxu0 %v195
    %309 = vmatprep.subr.bf16.mxu0 0
    %310 = vmatpush1.bf16.msra.mxu0 0
    %311 = vmatprep.subr.bf16.mxu0 0
    %312 = vmatpush1.bf16.msra.mxu0 0
    %313 = vmatprep.subr.bf16.mxu0 0
    %314 = vmatpush1.bf16.msra.mxu0 0
    %315 = vmatprep.subr.bf16.mxu0 0
    %316 = vmatpush1.bf16.msra.mxu0 0
    %317 = vmatprep.subr.bf16.mxu0 0
    %318 = vmatpush1.bf16.msra.mxu0 0
    %319 = vmatprep.subr.bf16.mxu0 0
    %320 = vmatpush1.bf16.msra.mxu0 0
    %321 = vmatprep.subr.bf16.mxu0 0
    %322 = vmatpush1.bf16.msra.mxu0 0
    %323 = vmatprep.subr.bf16.mxu0 0
    %324 = vmatpush1.bf16.msra.mxu0 0
    %325 = vmatprep.subr.bf16.mxu0 0
    %326 = vmatpush1.bf16.msra.mxu0 0
    %327 = vmatprep.subr.bf16.mxu0 0
    %328 = vmatpush1.bf16.msra.mxu0 0
    %329 = vmatprep.subr.bf16.mxu0 0
    %330 = vmatpush1.bf16.msra.mxu0 0
    %331 = vmatprep.subr.bf16.mxu0 0
    %332 = vmatpush1.bf16.msra.mxu0 0
    %333 = vmatprep.subr.bf16.mxu0 0
    %334 = vmatpush1.bf16.msra.mxu0 0
    %335 = vmatprep.subr.bf16.mxu0 0
    %336 = vmatpush1.bf16.msra.mxu0 0
    %337 = vmatprep.mubr.bf16.mxu0 0
    %338 = vmatmul.mubr.bf16.gmra.mrb[0].mxu0 %v217
    %v339 = vpop.f32.mrb[0].mxu0
    %v340 = vadd.f32 %v114, %v339
    %v341 = vpop.f32.mrb[0].mxu0
    %v342 = vadd.f32 %v118, %v341
    %v343 = vpop.f32.mrb[0].mxu0
    %v344 = vadd.f32 %v114, %v343
    %v345 = vpop.f32.mrb[0].mxu0
    %v346 = vadd.f32 %v118, %v345
    %347 = vdwg.mxu0
    %348 = vmatprep.subr.bf16.mxu0 %v190
    %349 = vmatpush1.bf16.msra.mxu0 %v189
    %350 = vmatprep.subr.bf16.mxu0 %v198
    %351 = vmatpush1.bf16.msra.mxu0 %v197
    %352 = vmatprep.subr.bf16.mxu0 0
    %353 = vmatpush1.bf16.msra.mxu0 0
    %354 = vmatprep.subr.bf16.mxu0 0
    %355 = vmatpush1.bf16.msra.mxu0 0
    %356 = vmatprep.subr.bf16.mxu0 0
    %357 = vmatpush1.bf16.msra.mxu0 0
    %358 = vmatprep.subr.bf16.mxu0 0
    %359 = vmatpush1.bf16.msra.mxu0 0
    %360 = vmatprep.subr.bf16.mxu0 0
    %361 = vmatpush1.bf16.msra.mxu0 0
    %362 = vmatprep.subr.bf16.mxu0 0
    %363 = vmatpush1.bf16.msra.mxu0 0
    %364 = vmatprep.subr.bf16.mxu0 0
    %365 = vmatpush1.bf16.msra.mxu0 0
    %366 = vmatprep.subr.bf16.mxu0 0
    %367 = vmatpush1.bf16.msra.mxu0 0
    %368 = vmatprep.subr.bf16.mxu0 0
    %369 = vmatpush1.bf16.msra.mxu0 0
    %370 = vmatprep.subr.bf16.mxu0 0
    %371 = vmatpush1.bf16.msra.mxu0 0
    %372 = vmatprep.subr.bf16.mxu0 0
    %373 = vmatpush1.bf16.msra.mxu0 0
    %374 = vmatprep.subr.bf16.mxu0 0
    %375 = vmatpush1.bf16.msra.mxu0 0
    %376 = vmatprep.subr.bf16.mxu0 0
    %377 = vmatpush1.bf16.msra.mxu0 0
    %378 = vmatprep.subr.bf16.mxu0 0
    %379 = vmatpush1.bf16.msra.mxu0 0
    %380 = vmatprep.mubr.bf16.mxu0 0
    %381 = vmatmul.mubr.bf16.gmra.mrb[0].mxu0 %v217
    %v382 = vpop.f32.mrb[0].mxu0
    %v383 = vadd.f32 %v122, %v382
    %v384 = vpop.f32.mrb[0].mxu0
    %v385 = vadd.f32 %v126, %v384
    %v386 = vpop.f32.mrb[0].mxu0
    %v387 = vadd.f32 %v122, %v386
    %v388 = vpop.f32.mrb[0].mxu0
    %v389 = vadd.f32 %v126, %v388
    %390 = vdwg.mxu0
    %v391 = vmul.f32 %v254, 0.5
    %v392 = vmul.f32 %v256, 0.5
    %v393 = vmul.f32 %v297, 0.5
    %v394 = vmul.f32 %v299, 0.5
    %v395 = vmul.f32 %v340, 0.5
    %v396 = vmul.f32 %v342, 0.5
    %v397 = vmul.f32 %v383, 0.5
    %v398 = vmul.f32 %v385, 0.5
    %v399 = vmul.f32 %v258, 0.5
    %v400 = vmul.f32 %v260, 0.5
    %v401 = vmul.f32 %v301, 0.5
    %v402 = vmul.f32 %v303, 0.5
    %v403 = vmul.f32 %v344, 0.5
    %v404 = vmul.f32 %v346, 0.5
    %v405 = vmul.f32 %v387, 0.5
    %v406 = vmul.f32 %v389, 0.5
    %v407 = vmul.f32 %v254, 0.044715
    %v408 = vmul.f32 %v256, 0.044715
    %v409 = vmul.f32 %v297, 0.044715
    %v410 = vmul.f32 %v299, 0.044715
    %v411 = vmul.f32 %v340, 0.044715
    %v412 = vmul.f32 %v342, 0.044715
    %v413 = vmul.f32 %v383, 0.044715
    %v414 = vmul.f32 %v385, 0.044715
    %v415 = vmul.f32 %v258, 0.044715
    %v416 = vmul.f32 %v260, 0.044715
    %v417 = vmul.f32 %v301, 0.044715
    %v418 = vmul.f32 %v303, 0.044715
    %v419 = vmul.f32 %v344, 0.044715
    %v420 = vmul.f32 %v346, 0.044715
    %v421 = vmul.f32 %v387, 0.044715
    %v422 = vmul.f32 %v389, 0.044715
    %v423 = vmul.f32 %v407, %v254
    %v424 = vmul.f32 %v408, %v256
    %v425 = vmul.f32 %v409, %v297
    %v426 = vmul.f32 %v410, %v299
    %v427 = vmul.f32 %v411, %v340
    %v428 = vmul.f32 %v412, %v342
    %v429 = vmul.f32 %v413, %v383
    %v430 = vmul.f32 %v414, %v385
    %v431 = vmul.f32 %v415, %v258
    %v432 = vmul.f32 %v416, %v260
    %v433 = vmul.f32 %v417, %v301
    %v434 = vmul.f32 %v418, %v303
    %v435 = vmul.f32 %v419, %v344
    %v436 = vmul.f32 %v420, %v346
    %v437 = vmul.f32 %v421, %v387
    %v438 = vmul.f32 %v422, %v389
    %v439 = vmul.f32 %v423, %v254
    %v440 = vmul.f32 %v424, %v256
    %v441 = vmul.f32 %v425, %v297
    %v442 = vmul.f32 %v426, %v299
    %v443 = vmul.f32 %v427, %v340
    %v444 = vmul.f32 %v428, %v342
    %v445 = vmul.f32 %v429, %v383
    %v446 = vmul.f32 %v430, %v385
    %v447 = vmul.f32 %v431, %v258
    %v448 = vmul.f32 %v432, %v260
    %v449 = vmul.f32 %v433, %v301
    %v450 = vmul.f32 %v434, %v303
    %v451 = vmul.f32 %v435, %v344
    %v452 = vmul.f32 %v436, %v346
    %v453 = vmul.f32 %v437, %v387
    %v454 = vmul.f32 %v438, %v389
    %v455 = vadd.f32 %v254, %v439
    %v456 = vadd.f32 %v256, %v440
    %v457 = vadd.f32 %v297, %v441
    %v458 = vadd.f32 %v299, %v442
    %v459 = vadd.f32 %v340, %v443
    %v460 = vadd.f32 %v342, %v444
    %v461 = vadd.f32 %v383, %v445
    %v462 = vadd.f32 %v385, %v446
    %v463 = vadd.f32 %v258, %v447
    %v464 = vadd.f32 %v260, %v448
    %v465 = vadd.f32 %v301, %v449
    %v466 = vadd.f32 %v303, %v450
    %v467 = vadd.f32 %v344, %v451
    %v468 = vadd.f32 %v346, %v452
    %v469 = vadd.f32 %v387, %v453
    %v470 = vadd.f32 %v389, %v454
    %v471 = vmul.f32 %v455, 0.7978846
    %v472 = vmul.f32 %v456, 0.7978846
    %v473 = vmul.f32 %v457, 0.7978846
    %v474 = vmul.f32 %v458, 0.7978846
    %v475 = vmul.f32 %v459, 0.7978846
    %v476 = vmul.f32 %v460, 0.7978846
    %v477 = vmul.f32 %v461, 0.7978846
    %v478 = vmul.f32 %v462, 0.7978846
    %v479 = vmul.f32 %v463, 0.7978846
    %v480 = vmul.f32 %v464, 0.7978846
    %v481 = vmul.f32 %v465, 0.7978846
    %v482 = vmul.f32 %v466, 0.7978846
    %v483 = vmul.f32 %v467, 0.7978846
    %v484 = vmul.f32 %v468, 0.7978846
    %v485 = vmul.f32 %v469, 0.7978846
    %v486 = vmul.f32 %v470, 0.7978846
    %v487 = vtanh.pop %v471
    %v488 = vtanh.pop %v472
    %v489 = vtanh.pop %v473
    %v490 = vtanh.pop %v474
    %v491 = vtanh.pop %v475
    %v492 = vtanh.pop %v476
    %v493 = vtanh.pop %v477
    %v494 = vtanh.pop %v478
    %v495 = vtanh.pop %v479
    %v496 = vtanh.pop %v480
    %v497 = vtanh.pop %v481
    %v498 = vtanh.pop %v482
    %v499 = vtanh.pop %v483
    %v500 = vtanh.pop %v484
    %v501 = vtanh.pop %v485
    %v502 = vtanh.pop %v486
    %v503 = vadd.f32 %v487, 1.0
    %v504 = vadd.f32 %v488, 1.0
    %v505 = vadd.f32 %v489, 1.0
    %v506 = vadd.f32 %v490, 1.0
    %v507 = vadd.f32 %v491, 1.0
    %v508 = vadd.f32 %v492, 1.0
    %v509 = vadd.f32 %v493, 1.0
    %v510 = vadd.f32 %v494, 1.0
    %v511 = vadd.f32 %v495, 1.0
    %v512 = vadd.f32 %v496, 1.0
    %v513 = vadd.f32 %v497, 1.0
    %v514 = vadd.f32 %v498, 1.0
    %v515 = vadd.f32 %v499, 1.0
    %v516 = vadd.f32 %v500, 1.0
    %v517 = vadd.f32 %v501, 1.0
    %v518 = vadd.f32 %v502, 1.0
    %v519 = vmul.f32 %v391, %v503
    %v520 = vmul.f32 %v392, %v504
    %v521 = vmul.f32 %v393, %v505
    %v522 = vmul.f32 %v394, %v506
    %v523 = vmul.f32 %v395, %v507
    %v524 = vmul.f32 %v396, %v508
    %v525 = vmul.f32 %v397, %v509
    %v526 = vmul.f32 %v398, %v510
    %v527 = vmul.f32 %v399, %v511
    %v528 = vmul.f32 %v400, %v512
    %v529 = vmul.f32 %v401, %v513
    %v530 = vmul.f32 %v402, %v514
    %v531 = vmul.f32 %v403, %v515
    %v532 = vmul.f32 %v404, %v516
    %v533 = vmul.f32 %v405, %v517
    %v534 = vmul.f32 %v406, %v518
    %v535 = vpack.c.bf16 %v527, %v519
    %v536 = vpack.c.bf16 %v528, %v520
    %v537 = vpack.c.bf16 %v529, %v521
    %v538 = vpack.c.bf16 %v530, %v522
    %v539 = vpack.c.bf16 %v531, %v523
    %v540 = vpack.c.bf16 %v532, %v524
    %v541 = vpack.c.bf16 %v533, %v525
    %v542 = vpack.c.bf16 %v534, %v526
    %v543 = vld [vmem:[#allocation7] sm:$0xf]
    %v544 = vld [vmem:[#allocation7 + $0x4] sm:$0xf]
    %v545 = vld [vmem:[#allocation7 + $0x8] sm:$0xf]
    %v546 = vld [vmem:[#allocation7 + $0xc] sm:$0xf]
    %v547 = vld [vmem:[#allocation7 + $0x10] sm:$0xf]
    %v548 = vld [vmem:[#allocation7 + $0x14] sm:$0xf]
    %v549 = vld [vmem:[#allocation7 + $0x18] sm:$0xf]
    %v550 = vld [vmem:[#allocation7 + $0x1c] sm:$0xf]
    %v551 = vld [vmem:[#allocation7 + $0x20] sm:$0xf]
    %v552 = vld [vmem:[#allocation7 + $0x24] sm:$0xf]
    %v553 = vld [vmem:[#allocation7 + $0x28] sm:$0xf]
    %v554 = vld [vmem:[#allocation7 + $0x2c] sm:$0xf]
    %v555 = vld [vmem:[#allocation7 + $0x30] sm:$0xf]
    %v556 = vld [vmem:[#allocation7 + $0x34] sm:$0xf]
    %v557 = vld [vmem:[#allocation7 + $0x38] sm:$0xf]
    %v558 = vld [vmem:[#allocation7 + $0x3c] sm:$0xf]
    %v559 = vld [vmem:[#allocation7 + $0x40] sm:$0xf]
    %v560 = vld [vmem:[#allocation7 + $0x44] sm:$0xf]
    %v561 = vld [vmem:[#allocation7 + $0x48] sm:$0xf]
    %v562 = vld [vmem:[#allocation7 + $0x4c] sm:$0xf]
    %v563 = vld [vmem:[#allocation7 + $0x50] sm:$0xf]
    %v564 = vld [vmem:[#allocation7 + $0x54] sm:$0xf]
    %v565 = vld [vmem:[#allocation7 + $0x58] sm:$0xf]
    %v566 = vld [vmem:[#allocation7 + $0x5c] sm:$0xf]
    %v567 = vld [vmem:[#allocation7 + $0x60] sm:$0xf]
    %v568 = vld [vmem:[#allocation7 + $0x64] sm:$0xf]
    %v569 = vld [vmem:[#allocation7 + $0x68] sm:$0xf]
    %v570 = vld [vmem:[#allocation7 + $0x6c] sm:$0xf]
    %v571 = vld [vmem:[#allocation7 + $0x70] sm:$0xf]
    %v572 = vld [vmem:[#allocation7 + $0x74] sm:$0xf]
    %v573 = vld [vmem:[#allocation7 + $0x78] sm:$0xf]
    %v574 = vld [vmem:[#allocation7 + $0x7c] sm:$0xf]
    %v575 = vld [vmem:[#allocation7 + $0x80] sm:$0xf]
    %v576 = vld [vmem:[#allocation7 + $0x84] sm:$0xf]
    %v577 = vld [vmem:[#allocation7 + $0x88] sm:$0xf]
    %v578 = vld [vmem:[#allocation7 + $0x8c] sm:$0xf]
    %v579 = vld [vmem:[#allocation7 + $0x90] sm:$0xf]
    %v580 = vld [vmem:[#allocation7 + $0x94] sm:$0xf]
    %v581 = vld [vmem:[#allocation7 + $0x98] sm:$0xf]
    %v582 = vld [vmem:[#allocation7 + $0x9c] sm:$0xf]
    %v583 = vld [vmem:[#allocation7 + $0xa0] sm:$0xf]
    %v584 = vld [vmem:[#allocation7 + $0xa4] sm:$0xf]
    %v585 = vld [vmem:[#allocation7 + $0xa8] sm:$0xf]
    %v586 = vld [vmem:[#allocation7 + $0xac] sm:$0xf]
    %v587 = vld [vmem:[#allocation7 + $0xb0] sm:$0xf]
    %v588 = vld [vmem:[#allocation7 + $0xb4] sm:$0xf]
    %v589 = vld [vmem:[#allocation7 + $0xb8] sm:$0xf]
    %v590 = vld [vmem:[#allocation7 + $0xbc] sm:$0xf]
    %v591 = vld [vmem:[#allocation7 + $0xc0] sm:$0xf]
    %v592 = vld [vmem:[#allocation7 + $0xc4] sm:$0xf]
    %v593 = vld [vmem:[#allocation7 + $0xc8] sm:$0xf]
    %v594 = vld [vmem:[#allocation7 + $0xcc] sm:$0xf]
    %v595 = vld [vmem:[#allocation7 + $0xd0] sm:$0xf]
    %v596 = vld [vmem:[#allocation7 + $0xd4] sm:$0xf]
    %v597 = vld [vmem:[#allocation7 + $0xd8] sm:$0xf]
    %v598 = vld [vmem:[#allocation7 + $0xdc] sm:$0xf]
    %v599 = vld [vmem:[#allocation7 + $0xe0] sm:$0xf]
    %v600 = vld [vmem:[#allocation7 + $0xe4] sm:$0xf]
    %v601 = vld [vmem:[#allocation7 + $0xe8] sm:$0xf]
    %v602 = vld [vmem:[#allocation7 + $0xec] sm:$0xf]
    %v603 = vld [vmem:[#allocation7 + $0xf0] sm:$0xf]
    %v604 = vld [vmem:[#allocation7 + $0xf4] sm:$0xf]
    %v605 = vld [vmem:[#allocation7 + $0xf8] sm:$0xf]
    %v606 = vld [vmem:[#allocation7 + $0xfc] sm:$0xf]
    %v607 = vld [vmem:[#allocation7 + $0x100] sm:$0xf]
    %v608 = vld [vmem:[#allocation7 + $0x104] sm:$0xf]
    %v609 = vld [vmem:[#allocation7 + $0x108] sm:$0xf]
    %v610 = vld [vmem:[#allocation7 + $0x10c] sm:$0xf]
    %v611 = vld [vmem:[#allocation7 + $0x110] sm:$0xf]
    %v612 = vld [vmem:[#allocation7 + $0x114] sm:$0xf]
    %v613 = vld [vmem:[#allocation7 + $0x118] sm:$0xf]
    %v614 = vld [vmem:[#allocation7 + $0x11c] sm:$0xf]
    %v615 = vld [vmem:[#allocation7 + $0x120] sm:$0xf]
    %v616 = vld [vmem:[#allocation7 + $0x124] sm:$0xf]
    %v617 = vld [vmem:[#allocation7 + $0x128] sm:$0xf]
    %v618 = vld [vmem:[#allocation7 + $0x12c] sm:$0xf]
    %v619 = vld [vmem:[#allocation7 + $0x130] sm:$0xf]
    %v620 = vld [vmem:[#allocation7 + $0x134] sm:$0xf]
    %v621 = vld [vmem:[#allocation7 + $0x138] sm:$0xf]
    %v622 = vld [vmem:[#allocation7 + $0x13c] sm:$0xf]
    %v623 = vld [vmem:[#allocation7 + $0x140] sm:$0xf]
    %v624 = vld [vmem:[#allocation7 + $0x144] sm:$0xf]
    %v625 = vld [vmem:[#allocation7 + $0x148] sm:$0xf]
    %v626 = vld [vmem:[#allocation7 + $0x14c] sm:$0xf]
    %v627 = vld [vmem:[#allocation7 + $0x150] sm:$0xf]
    %v628 = vld [vmem:[#allocation7 + $0x154] sm:$0xf]
    %v629 = vld [vmem:[#allocation7 + $0x158] sm:$0xf]
    %v630 = vld [vmem:[#allocation7 + $0x15c] sm:$0xf]
    %v631 = vld [vmem:[#allocation7 + $0x160] sm:$0xf]
    %v632 = vld [vmem:[#allocation7 + $0x164] sm:$0xf]
    %v633 = vld [vmem:[#allocation7 + $0x168] sm:$0xf]
    %v634 = vld [vmem:[#allocation7 + $0x16c] sm:$0xf]
    %v635 = vld [vmem:[#allocation7 + $0x170] sm:$0xf]
    %v636 = vld [vmem:[#allocation7 + $0x174] sm:$0xf]
    %v637 = vld [vmem:[#allocation7 + $0x178] sm:$0xf]
    %v638 = vld [vmem:[#allocation7 + $0x17c] sm:$0xf]
    %v639 = vld [vmem:[#allocation7 + $0x180] sm:$0xf]
    %v640 = vld [vmem:[#allocation7 + $0x184] sm:$0xf]
    %v641 = vld [vmem:[#allocation7 + $0x188] sm:$0xf]
    %v642 = vld [vmem:[#allocation7 + $0x18c] sm:$0xf]
    %v643 = vld [vmem:[#allocation7 + $0x190] sm:$0xf]
    %v644 = vld [vmem:[#allocation7 + $0x194] sm:$0xf]
    %v645 = vld [vmem:[#allocation7 + $0x198] sm:$0xf]
    %v646 = vld [vmem:[#allocation7 + $0x19c] sm:$0xf]
    %v647 = vld [vmem:[#allocation7 + $0x1a0] sm:$0xf]
    %v648 = vld [vmem:[#allocation7 + $0x1a4] sm:$0xf]
    %v649 = vld [vmem:[#allocation7 + $0x1a8] sm:$0xf]
    %v650 = vld [vmem:[#allocation7 + $0x1ac] sm:$0xf]
    %v651 = vld [vmem:[#allocation7 + $0x1b0] sm:$0xf]
    %v652 = vld [vmem:[#allocation7 + $0x1b4] sm:$0xf]
    %v653 = vld [vmem:[#allocation7 + $0x1b8] sm:$0xf]
    %v654 = vld [vmem:[#allocation7 + $0x1bc] sm:$0xf]
    %v655 = vld [vmem:[#allocation7 + $0x1c0] sm:$0xf]
    %v656 = vld [vmem:[#allocation7 + $0x1c4] sm:$0xf]
    %v657 = vld [vmem:[#allocation7 + $0x1c8] sm:$0xf]
    %v658 = vld [vmem:[#allocation7 + $0x1cc] sm:$0xf]
    %v659 = vld [vmem:[#allocation7 + $0x1d0] sm:$0xf]
    %v660 = vld [vmem:[#allocation7 + $0x1d4] sm:$0xf]
    %v661 = vld [vmem:[#allocation7 + $0x1d8] sm:$0xf]
    %v662 = vld [vmem:[#allocation7 + $0x1dc] sm:$0xf]
    %v663 = vld [vmem:[#allocation7 + $0x1e0] sm:$0xf]
    %v664 = vld [vmem:[#allocation7 + $0x1e4] sm:$0xf]
    %v665 = vld [vmem:[#allocation7 + $0x1e8] sm:$0xf]
    %v666 = vld [vmem:[#allocation7 + $0x1ec] sm:$0xf]
    %v667 = vld [vmem:[#allocation7 + $0x1f0] sm:$0xf]
    %v668 = vld [vmem:[#allocation7 + $0x1f4] sm:$0xf]
    %v669 = vld [vmem:[#allocation7 + $0x1f8] sm:$0xf]
    %v670 = vld [vmem:[#allocation7 + $0x1fc] sm:$0xf]
    %v671 = vld [vmem:[%s4] sm:$0x1]
    %v673 = vlaneseq
    %v674 = vshrl.u32 %v673, 7
    %v675 = vsub.s32 0, %v674
    %v676 = vrot.slane %v671, %v675
    %v806 = vunpack.c.l.b16 %v543
    %v807 = vunpack.c.l.b16 %v544
    %v808 = vunpack.c.l.b16 %v545
    %v809 = vunpack.c.l.b16 %v546
    %v810 = vunpack.c.l.b16 %v547
    %v811 = vunpack.c.l.b16 %v548
    %v812 = vunpack.c.l.b16 %v549
    %v813 = vunpack.c.l.b16 %v550
    %v814 = vunpack.c.l.b16 %v551
    %v815 = vunpack.c.l.b16 %v552
    %v816 = vunpack.c.l.b16 %v553
    %v817 = vunpack.c.l.b16 %v554
    %v818 = vunpack.c.l.b16 %v555
    %v819 = vunpack.c.l.b16 %v556
    %v820 = vunpack.c.l.b16 %v557
    %v821 = vunpack.c.l.b16 %v558
    %v822 = vunpack.c.l.b16 %v559
    %v823 = vunpack.c.l.b16 %v560
    %v824 = vunpack.c.l.b16 %v561
    %v825 = vunpack.c.l.b16 %v562
    %v826 = vunpack.c.l.b16 %v563
    %v827 = vunpack.c.l.b16 %v564
    %v828 = vunpack.c.l.b16 %v565
    %v829 = vunpack.c.l.b16 %v566
    %v830 = vunpack.c.l.b16 %v567
    %v831 = vunpack.c.l.b16 %v568
    %v832 = vunpack.c.l.b16 %v569
    %v833 = vunpack.c.l.b16 %v570
    %v834 = vunpack.c.l.b16 %v571
    %v835 = vunpack.c.l.b16 %v572
    %v836 = vunpack.c.l.b16 %v573
    %v837 = vunpack.c.l.b16 %v574
    %v838 = vunpack.c.l.b16 %v575
    %v839 = vunpack.c.l.b16 %v576
    %v840 = vunpack.c.l.b16 %v577
    %v841 = vunpack.c.l.b16 %v578
    %v842 = vunpack.c.l.b16 %v579
    %v843 = vunpack.c.l.b16 %v580
    %v844 = vunpack.c.l.b16 %v581
    %v845 = vunpack.c.l.b16 %v582
    %v846 = vunpack.c.l.b16 %v583
    %v847 = vunpack.c.l.b16 %v584
    %v848 = vunpack.c.l.b16 %v585
    %v849 = vunpack.c.l.b16 %v586
    %v850 = vunpack.c.l.b16 %v587
    %v851 = vunpack.c.l.b16 %v588
    %v852 = vunpack.c.l.b16 %v589
    %v853 = vunpack.c.l.b16 %v590
    %v854 = vunpack.c.l.b16 %v591
    %v855 = vunpack.c.l.b16 %v592
    %v856 = vunpack.c.l.b16 %v593
    %v857 = vunpack.c.l.b16 %v594
    %v858 = vunpack.c.l.b16 %v595
    %v859 = vunpack.c.l.b16 %v596
    %v860 = vunpack.c.l.b16 %v597
    %v861 = vunpack.c.l.b16 %v598
    %v862 = vunpack.c.l.b16 %v599
    %v863 = vunpack.c.l.b16 %v600
    %v864 = vunpack.c.l.b16 %v601
    %v865 = vunpack.c.l.b16 %v602
    %v866 = vunpack.c.l.b16 %v603
    %v867 = vunpack.c.l.b16 %v604
    %v868 = vunpack.c.l.b16 %v605
    %v869 = vunpack.c.l.b16 %v606
    %v870 = vunpack.c.l.b16 %v607
    %v871 = vunpack.c.l.b16 %v608
    %v872 = vunpack.c.l.b16 %v609
    %v873 = vunpack.c.l.b16 %v610
    %v874 = vunpack.c.l.b16 %v611
    %v875 = vunpack.c.l.b16 %v612
    %v876 = vunpack.c.l.b16 %v613
    %v877 = vunpack.c.l.b16 %v614
    %v878 = vunpack.c.l.b16 %v615
    %v879 = vunpack.c.l.b16 %v616
    %v880 = vunpack.c.l.b16 %v617
    %v881 = vunpack.c.l.b16 %v618
    %v882 = vunpack.c.l.b16 %v619
    %v883 = vunpack.c.l.b16 %v620
    %v884 = vunpack.c.l.b16 %v621
    %v885 = vunpack.c.l.b16 %v622
    %v886 = vunpack.c.l.b16 %v623
    %v887 = vunpack.c.l.b16 %v624
    %v888 = vunpack.c.l.b16 %v625
    %v889 = vunpack.c.l.b16 %v626
    %v890 = vunpack.c.l.b16 %v627
    %v891 = vunpack.c.l.b16 %v628
    %v892 = vunpack.c.l.b16 %v629
    %v893 = vunpack.c.l.b16 %v630
    %v894 = vunpack.c.l.b16 %v631
    %v895 = vunpack.c.l.b16 %v632
    %v896 = vunpack.c.l.b16 %v633
    %v897 = vunpack.c.l.b16 %v634
    %v898 = vunpack.c.l.b16 %v635
    %v899 = vunpack.c.l.b16 %v636
    %v900 = vunpack.c.l.b16 %v637
    %v901 = vunpack.c.l.b16 %v638
    %v902 = vunpack.c.l.b16 %v639
    %v903 = vunpack.c.l.b16 %v640
    %v904 = vunpack.c.l.b16 %v641
    %v905 = vunpack.c.l.b16 %v642
    %v906 = vunpack.c.l.b16 %v643
    %v907 = vunpack.c.l.b16 %v644
    %v908 = vunpack.c.l.b16 %v645
    %v909 = vunpack.c.l.b16 %v646
    %v910 = vunpack.c.l.b16 %v647
    %v911 = vunpack.c.l.b16 %v648
    %v912 = vunpack.c.l.b16 %v649
    %v913 = vunpack.c.l.b16 %v650
    %v914 = vunpack.c.l.b16 %v651
    %v915 = vunpack.c.l.b16 %v652
    %v916 = vunpack.c.l.b16 %v653
    %v917 = vunpack.c.l.b16 %v654
    %v918 = vunpack.c.l.b16 %v655
    %v919 = vunpack.c.l.b16 %v656
    %v920 = vunpack.c.l.b16 %v657
    %v921 = vunpack.c.l.b16 %v658
    %v922 = vunpack.c.l.b16 %v659
    %v923 = vunpack.c.l.b16 %v660
    %v924 = vunpack.c.l.b16 %v661
    %v925 = vunpack.c.l.b16 %v662
    %v926 = vunpack.c.l.b16 %v663
    %v927 = vunpack.c.l.b16 %v664
    %v928 = vunpack.c.l.b16 %v665
    %v929 = vunpack.c.l.b16 %v666
    %v930 = vunpack.c.l.b16 %v667
    %v931 = vunpack.c.l.b16 %v668
    %v932 = vunpack.c.l.b16 %v669
    %v933 = vunpack.c.l.b16 %v670
    %v934 = vpack.c.b16 %v807, %v806
    %v935 = vpack.c.b16 %v809, %v808
    %v936 = vpack.c.b16 %v811, %v810
    %v937 = vpack.c.b16 %v813, %v812
    %v938 = vpack.c.b16 %v815, %v814
    %v939 = vpack.c.b16 %v817, %v816
    %v940 = vpack.c.b16 %v819, %v818
    %v941 = vpack.c.b16 %v821, %v820
    %v942 = vpack.c.b16 %v823, %v822
    %v943 = vpack.c.b16 %v825, %v824
    %v944 = vpack.c.b16 %v827, %v826
    %v945 = vpack.c.b16 %v829, %v828
    %v946 = vpack.c.b16 %v831, %v830
    %v947 = vpack.c.b16 %v833, %v832
    %v948 = vpack.c.b16 %v835, %v834
    %v949 = vpack.c.b16 %v837, %v836
    %v950 = vpack.c.b16 %v839, %v838
    %v951 = vpack.c.b16 %v841, %v840
    %v952 = vpack.c.b16 %v843, %v842
    %v953 = vpack.c.b16 %v845, %v844
    %v954 = vpack.c.b16 %v847, %v846
    %v955 = vpack.c.b16 %v849, %v848
    %v956 = vpack.c.b16 %v851, %v850
    %v957 = vpack.c.b16 %v853, %v852
    %v958 = vpack.c.b16 %v855, %v854
    %v959 = vpack.c.b16 %v857, %v856
    %v960 = vpack.c.b16 %v859, %v858
    %v961 = vpack.c.b16 %v861, %v860
    %v962 = vpack.c.b16 %v863, %v862
    %v963 = vpack.c.b16 %v865, %v864
    %v964 = vpack.c.b16 %v867, %v866
    %v965 = vpack.c.b16 %v869, %v868
    %v966 = vpack.c.b16 %v871, %v870
    %v967 = vpack.c.b16 %v873, %v872
    %v968 = vpack.c.b16 %v875, %v874
    %v969 = vpack.c.b16 %v877, %v876
    %v970 = vpack.c.b16 %v879, %v878
    %v971 = vpack.c.b16 %v881, %v880
    %v972 = vpack.c.b16 %v883, %v882
    %v973 = vpack.c.b16 %v885, %v884
    %v974 = vpack.c.b16 %v887, %v886
    %v975 = vpack.c.b16 %v889, %v888
    %v976 = vpack.c.b16 %v891, %v890
    %v977 = vpack.c.b16 %v893, %v892
    %v978 = vpack.c.b16 %v895, %v894
    %v979 = vpack.c.b16 %v897, %v896
    %v980 = vpack.c.b16 %v899, %v898
    %v981 = vpack.c.b16 %v901, %v900
    %v982 = vpack.c.b16 %v903, %v902
    %v983 = vpack.c.b16 %v905, %v904
    %v984 = vpack.c.b16 %v907, %v906
    %v985 = vpack.c.b16 %v909, %v908
    %v986 = vpack.c.b16 %v911, %v910
    %v987 = vpack.c.b16 %v913, %v912
    %v988 = vpack.c.b16 %v915, %v914
    %v989 = vpack.c.b16 %v917, %v916
    %v990 = vpack.c.b16 %v919, %v918
    %v991 = vpack.c.b16 %v921, %v920
    %v992 = vpack.c.b16 %v923, %v922
    %v993 = vpack.c.b16 %v925, %v924
    %v994 = vpack.c.b16 %v927, %v926
    %v995 = vpack.c.b16 %v929, %v928
    %v996 = vpack.c.b16 %v931, %v930
    %v997 = vpack.c.b16 %v933, %v932
    %1062 = vmatprep.subr.bf16.mxu0 0
    %1063 = vmatpush1.bf16.msra.mxu0 %v934
    %1064 = vmatprep.subr.bf16.mxu0 0
    %1065 = vmatpush1.bf16.msra.mxu0 %v935
    %1066 = vmatprep.subr.bf16.mxu0 0
    %1067 = vmatpush1.bf16.msra.mxu0 %v936
    %1068 = vmatprep.subr.bf16.mxu0 0
    %1069 = vmatpush1.bf16.msra.mxu0 %v937
    %1070 = vmatprep.subr.bf16.mxu0 0
    %1071 = vmatpush1.bf16.msra.mxu0 %v938
    %1072 = vmatprep.subr.bf16.mxu0 0
    %1073 = vmatpush1.bf16.msra.mxu0 %v939
    %1074 = vmatprep.subr.bf16.mxu0 0
    %1075 = vmatpush1.bf16.msra.mxu0 %v940
    %1076 = vmatprep.subr.bf16.mxu0 0
    %1077 = vmatpush1.bf16.msra.mxu0 %v941
    %1078 = vmatprep.subr.bf16.mxu0 0
    %1079 = vmatpush1.bf16.msra.mxu0 %v942
    %1080 = vmatprep.subr.bf16.mxu0 0
    %1081 = vmatpush1.bf16.msra.mxu0 %v943
    %1082 = vmatprep.subr.bf16.mxu0 0
    %1083 = vmatpush1.bf16.msra.mxu0 %v944
    %1084 = vmatprep.subr.bf16.mxu0 0
    %1085 = vmatpush1.bf16.msra.mxu0 %v945
    %1086 = vmatprep.subr.bf16.mxu0 0
    %1087 = vmatpush1.bf16.msra.mxu0 %v946
    %1088 = vmatprep.subr.bf16.mxu0 0
    %1089 = vmatpush1.bf16.msra.mxu0 %v947
    %1090 = vmatprep.subr.bf16.mxu0 0
    %1091 = vmatpush1.bf16.msra.mxu0 %v948
    %1092 = vmatprep.subr.bf16.mxu0 0
    %1093 = vmatpush1.bf16.msra.mxu0 %v949
    %1094 = vmatprep.mubr.bf16.mxu0 %v536
    %1095 = vmatmul.mubr.bf16.gmra.mrb[0].mxu0 %v535
    %v1096 = vpop.f32.mrb[0].mxu0
    %v1097 = vadd.f32 %v676, %v1096
    %v1098 = vpop.f32.mrb[0].mxu0
    %v1099 = vpop.f32.mrb[0].mxu0
    %v1100 = vadd.f32 %v676, %v1099
    %v1101 = vpop.f32.mrb[0].mxu0
    %1102 = vdwg.mxu0
    %1103 = vmatprep.subr.bf16.mxu0 0
    %1104 = vmatpush1.bf16.msra.mxu0 %v950
    %1105 = vmatprep.subr.bf16.mxu0 0
    %1106 = vmatpush1.bf16.msra.mxu0 %v951
    %1107 = vmatprep.subr.bf16.mxu0 0
    %1108 = vmatpush1.bf16.msra.mxu0 %v952
    %1109 = vmatprep.subr.bf16.mxu0 0
    %1110 = vmatpush1.bf16.msra.mxu0 %v953
    %1111 = vmatprep.subr.bf16.mxu0 0
    %1112 = vmatpush1.bf16.msra.mxu0 %v954
    %1113 = vmatprep.subr.bf16.mxu0 0
    %1114 = vmatpush1.bf16.msra.mxu0 %v955
    %1115 = vmatprep.subr.bf16.mxu0 0
    %1116 = vmatpush1.bf16.msra.mxu0 %v956
    %1117 = vmatprep.subr.bf16.mxu0 0
    %1118 = vmatpush1.bf16.msra.mxu0 %v957
    %1119 = vmatprep.subr.bf16.mxu0 0
    %1120 = vmatpush1.bf16.msra.mxu0 %v958
    %1121 = vmatprep.subr.bf16.mxu0 0
    %1122 = vmatpush1.bf16.msra.mxu0 %v959
    %1123 = vmatprep.subr.bf16.mxu0 0
    %1124 = vmatpush1.bf16.msra.mxu0 %v960
    %1125 = vmatprep.subr.bf16.mxu0 0
    %1126 = vmatpush1.bf16.msra.mxu0 %v961
    %1127 = vmatprep.subr.bf16.mxu0 0
    %1128 = vmatpush1.bf16.msra.mxu0 %v962
    %1129 = vmatprep.subr.bf16.mxu0 0
    %1130 = vmatpush1.bf16.msra.mxu0 %v963
    %1131 = vmatprep.subr.bf16.mxu0 0
    %1132 = vmatpush1.bf16.msra.mxu0 %v964
    %1133 = vmatprep.subr.bf16.mxu0 0
    %1134 = vmatpush1.bf16.msra.mxu0 %v965
    %1135 = vmatprep.mubr.bf16.mxu0 %v538
    %1136 = vmatmul.mubr.bf16.gmra.mrb[0].mxu0 %v537
    %v1137 = vpop.f32.mrb[0].mxu0
    %v1138 = vadd.f32 %v1097, %v1137
    %v1139 = vpop.f32.mrb[0].mxu0
    %v1140 = vpop.f32.mrb[0].mxu0
    %v1141 = vadd.f32 %v1100, %v1140
    %v1142 = vpop.f32.mrb[0].mxu0
    %1143 = vdwg.mxu0
    %1144 = vmatprep.subr.bf16.mxu0 0
    %1145 = vmatpush1.bf16.msra.mxu0 %v966
    %1146 = vmatprep.subr.bf16.mxu0 0
    %1147 = vmatpush1.bf16.msra.mxu0 %v967
    %1148 = vmatprep.subr.bf16.mxu0 0
    %1149 = vmatpush1.bf16.msra.mxu0 %v968
    %1150 = vmatprep.subr.bf16.mxu0 0
    %1151 = vmatpush1.bf16.msra.mxu0 %v969
    %1152 = vmatprep.subr.bf16.mxu0 0
    %1153 = vmatpush1.bf16.msra.mxu0 %v970
    %1154 = vmatprep.subr.bf16.mxu0 0
    %1155 = vmatpush1.bf16.msra.mxu0 %v971
    %1156 = vmatprep.subr.bf16.mxu0 0
    %1157 = vmatpush1.bf16.msra.mxu0 %v972
    %1158 = vmatprep.subr.bf16.mxu0 0
    %1159 = vmatpush1.bf16.msra.mxu0 %v973
    %1160 = vmatprep.subr.bf16.mxu0 0
    %1161 = vmatpush1.bf16.msra.mxu0 %v974
    %1162 = vmatprep.subr.bf16.mxu0 0
    %1163 = vmatpush1.bf16.msra.mxu0 %v975
    %1164 = vmatprep.subr.bf16.mxu0 0
    %1165 = vmatpush1.bf16.msra.mxu0 %v976
    %1166 = vmatprep.subr.bf16.mxu0 0
    %1167 = vmatpush1.bf16.msra.mxu0 %v977
    %1168 = vmatprep.subr.bf16.mxu0 0
    %1169 = vmatpush1.bf16.msra.mxu0 %v978
    %1170 = vmatprep.subr.bf16.mxu0 0
    %1171 = vmatpush1.bf16.msra.mxu0 %v979
    %1172 = vmatprep.subr.bf16.mxu0 0
    %1173 = vmatpush1.bf16.msra.mxu0 %v980
    %1174 = vmatprep.subr.bf16.mxu0 0
    %1175 = vmatpush1.bf16.msra.mxu0 %v981
    %1176 = vmatprep.mubr.bf16.mxu0 %v540
    %1177 = vmatmul.mubr.bf16.gmra.mrb[0].mxu0 %v539
    %v1178 = vpop.f32.mrb[0].mxu0
    %v1179 = vadd.f32 %v1138, %v1178
    %v1180 = vpop.f32.mrb[0].mxu0
    %v1181 = vpop.f32.mrb[0].mxu0
    %v1182 = vadd.f32 %v1141, %v1181
    %v1183 = vpop.f32.mrb[0].mxu0
    %1184 = vdwg.mxu0
    %1185 = vmatprep.subr.bf16.mxu0 0
    %1186 = vmatpush1.bf16.msra.mxu0 %v982
    %1187 = vmatprep.subr.bf16.mxu0 0
    %1188 = vmatpush1.bf16.msra.mxu0 %v983
    %1189 = vmatprep.subr.bf16.mxu0 0
    %1190 = vmatpush1.bf16.msra.mxu0 %v984
    %1191 = vmatprep.subr.bf16.mxu0 0
    %1192 = vmatpush1.bf16.msra.mxu0 %v985
    %1193 = vmatprep.subr.bf16.mxu0 0
    %1194 = vmatpush1.bf16.msra.mxu0 %v986
    %1195 = vmatprep.subr.bf16.mxu0 0
    %1196 = vmatpush1.bf16.msra.mxu0 %v987
    %1197 = vmatprep.subr.bf16.mxu0 0
    %1198 = vmatpush1.bf16.msra.mxu0 %v988
    %1199 = vmatprep.subr.bf16.mxu0 0
    %1200 = vmatpush1.bf16.msra.mxu0 %v989
    %1201 = vmatprep.subr.bf16.mxu0 0
    %1202 = vmatpush1.bf16.msra.mxu0 %v990
    %1203 = vmatprep.subr.bf16.mxu0 0
    %1204 = vmatpush1.bf16.msra.mxu0 %v991
    %1205 = vmatprep.subr.bf16.mxu0 0
    %1206 = vmatpush1.bf16.msra.mxu0 %v992
    %1207 = vmatprep.subr.bf16.mxu0 0
    %1208 = vmatpush1.bf16.msra.mxu0 %v993
    %1209 = vmatprep.subr.bf16.mxu0 0
    %1210 = vmatpush1.bf16.msra.mxu0 %v994
    %1211 = vmatprep.subr.bf16.mxu0 0
    %1212 = vmatpush1.bf16.msra.mxu0 %v995
    %1213 = vmatprep.subr.bf16.mxu0 0
    %1214 = vmatpush1.bf16.msra.mxu0 %v996
    %1215 = vmatprep.subr.bf16.mxu0 0
    %1216 = vmatpush1.bf16.msra.mxu0 %v997
    %1217 = vmatprep.mubr.bf16.mxu0 %v542
    %1218 = vmatmul.mubr.bf16.gmra.mrb[0].mxu0 %v541
    %v1219 = vpop.f32.mrb[0].mxu0
    %v1220 = vadd.f32 %v1179, %v1219
    %v1221 = vpop.f32.mrb[0].mxu0
    %v1222 = vpop.f32.mrb[0].mxu0
    %v1223 = vadd.f32 %v1182, %v1222
    %v1224 = vpop.f32.mrb[0].mxu0
    %1225 = vdwg.mxu0
    %vm1226 = vcmask 23552
    %1227 = vst.msk [vmem:[%s5] sm:$0xff] %vm1226, %v1220
    %1228 = vst.msk [vmem:[%s5 + $0x8] sm:$0xff] %vm1226, %v1223
    // Predicated region
    $region38: #{tpu_custom_call.1} parent=1 // pred_check
      _
    $region39: #{tpu_custom_call.1} parent=1 // pred_check_branch
      %1230 = sbr.rel (0) target = $region41
    $region40: #{tpu_custom_call.1} parent=1 // pred_region
      _
    $region41: #{tpu_custom_call.1} parent=1 // pred_fallthru
      _
    // Predicated region
    $region42: #{tpu_custom_call.1} parent=1 // pred_check
      _
    $region43: #{tpu_custom_call.1} parent=1 // pred_check_branch
      %1232 = sbr.rel (0) target = $region45
    $region44: #{tpu_custom_call.1} parent=1 // pred_region
      _
    $region45: #{tpu_custom_call.1} parent=1 // pred_fallthru
      _
    %1233 = vsyncpa [#allocation3], 1
    %1234 = vsyncpa [#allocation5], 1
    %1235 = vsyncpa [#allocation8], 1

</llo_original>
